<compile_context>
chip_gen: v7x
topology: tpu7x:2x2x1
jax: 0.10.0
libtpu: 0.0.40
codegen_flags: <defaults>
</compile_context>

<pallas_src>
import math

import jax
import jax.numpy as jnp
from jax import lax
from jax.experimental import pallas as pl
from jax.experimental.pallas import tpu as pltpu


def _arch_defaults():
    """(block_q, vmem_limit_bytes or None, heads-per-group) by TPU generation."""
    kind = ""
    try:
        kind = jax.devices()[0].device_kind.lower()
    except Exception:
        pass
    if "v7" in kind:
        # 64 MiB physical VMEM, 2 TensorCores: smaller query tiles, tight cap.
        return 128, 40 * 1024 * 1024, 4
    if "v6" in kind:
        return 512, 96 * 1024 * 1024, 4
    if "v5" in kind:
        return 512, 96 * 1024 * 1024, 2
    # Unknown generation: conservative tile, compiler-default VMEM limit.
    return 256, None, 2


# ----------------------------------------------------------------------------
# Tiled linear kernel:  y = x @ Wt + b   (Wt already transposed to (in, out))
# ----------------------------------------------------------------------------
def _linear_kernel(x_ref, wt_ref, b_ref, o_ref):
    y = jnp.dot(x_ref[...], wt_ref[...], preferred_element_type=jnp.float32)
    o_ref[...] = (y + b_ref[...]).astype(o_ref.dtype)


def pallas_linear(x, w_t, b, *, block_m=256, block_n=4096, out_dtype=None,
                  vmem_limit=None):
    """x: (S, d_in), w_t: (d_in, d_out), b: (d_out,) f32 -> (S, d_out).

    For d_out <= block_n the weight block index map is constant, so the weight
    is DMA'd once and stays resident across all row blocks.
    """
    S, d_in = x.shape
    d_out = w_t.shape[1]
    out_dtype = out_dtype or x.dtype
    bm = min(block_m, S)
    bn = d_out if d_out <= block_n else block_n
    grid = (pl.cdiv(S, bm), pl.cdiv(d_out, bn))

    cp_kwargs = dict(dimension_semantics=("parallel", "parallel"))
    if vmem_limit is not None:
        cp_kwargs["vmem_limit_bytes"] = vmem_limit

    return pl.pallas_call(
        _linear_kernel,
        grid=grid,
        out_shape=jax.ShapeDtypeStruct((S, d_out), out_dtype),
        in_specs=[
            pl.BlockSpec((bm, d_in), lambda mi, ni: (mi, 0)),
            pl.BlockSpec((d_in, bn), lambda mi, ni: (0, ni)),   # constant when bn==d_out
            pl.BlockSpec((1, bn), lambda mi, ni: (0, ni)),
        ],
        out_specs=pl.BlockSpec((bm, bn), lambda mi, ni: (mi, ni)),
        compiler_params=pltpu.CompilerParams(**cp_kwargs),
    )(x, w_t, b.reshape(1, d_out))


# ----------------------------------------------------------------------------
# Attention-with-type-scores kernel, output projection fused in.
# Grid = (query-row blocks, head groups); out block is revisited across groups.
# ----------------------------------------------------------------------------
def _make_attn_kernel(G, has_mask, store_attn):
    def kernel(*refs):
        i = 0
        q_ref = refs[i]; i += 1        # (G, bq, d_k)   compute dtype (Wq pre-scaled)
        k_ref = refs[i]; i += 1        # (G, S,  d_k)
        v_ref = refs[i]; i += 1        # (G, S,  d_k)
        ts_ref = refs[i]; i += 1       # (G, bq, S)
        bias_ref = None
        if has_mask:
            bias_ref = refs[i]; i += 1  # (bq, S) bf16 additive mask bias
        wot_ref = refs[i]; i += 1      # (h*d_k, d_model), VMEM-resident
        bo_ref = refs[i]; i += 1       # (1, d_model) f32
        o_ref = refs[i]; i += 1        # (bq, d_model) f32 accumulator
        p_ref = refs[i] if store_attn else None  # (G, bq, S)

        hi = pl.program_id(1)
        d_k = q_ref.shape[-1]

        ctxs = []
        for g in range(G):
            # scores = (q / sqrt(d_k)) @ k^T  -- scale folded into Wq already.
            s = lax.dot_general(q_ref[g], k_ref[g], (((1,), (1,)), ((), ())),
                                preferred_element_type=jnp.float32)   # (bq, S)
            if bias_ref is not None:
                s = s + bias_ref[...].astype(jnp.float32)

            m = jnp.max(s, axis=-1, keepdims=True)
            e = jnp.exp(s - m)
            denom = jnp.sum(e, axis=-1, keepdims=True)
            inv = pl.reciprocal(denom, approx=True)                   # EUP

            if store_attn:
                # exact p_attn = softmax(scores) * type_scores, written out.
                p = (e * inv) * ts_ref[g].astype(jnp.float32)
                p_ref[g] = p.astype(p_ref.dtype)
                pv = jnp.dot(p.astype(v_ref.dtype), v_ref[g],
                             preferred_element_type=jnp.float32)
                ctxs.append(pv)
            else:
                # Fast path: defer normalization past the PV matmul; do the
                # type_scores multiply in the compute dtype (merged with the
                # MXU operand cast).
                et = e.astype(ts_ref.dtype) * ts_ref[g]
                pv = jnp.dot(et.astype(v_ref.dtype), v_ref[g],
                             preferred_element_type=jnp.float32)
                ctxs.append(pv * inv)

        # Lane-dense (bq, G*d_k) context -> one fused output-projection matmul
        # with contraction G*d_k.
        ctx = ctxs[0] if G == 1 else jnp.concatenate(ctxs, axis=-1)

        @pl.when(hi == 0)
        def _init():
            o_ref[...] = jnp.broadcast_to(bo_ref[...], o_ref.shape).astype(o_ref.dtype)

        gk = G * d_k
        row = pl.multiple_of(hi * gk, gk)
        wo_blk = wot_ref[pl.ds(row, gk), :]                           # (G*d_k, d_model)
        o_ref[...] += jnp.dot(ctx.astype(wo_blk.dtype), wo_blk,
                              preferred_element_type=jnp.float32).astype(o_ref.dtype)

    return kernel


def pallas_attention_with_type_scores(q, k, v, type_scores, mask_bias, wo_t, bo,
                                      *, block_q=None, group=2,
                                      store_attn=False, vmem_limit=None):
    """q/k/v: (h, S, d_k) (q already scaled by 1/sqrt(d_k) via its weights);
    type_scores: (h, S, S); mask_bias: (S, S) bf16 additive bias or None;
    wo_t: (h*d_k, d_model) pre-transposed output weight; bo: (d_model,) f32.

    Returns (out (S, d_model) f32, p_attn (h, S, S) or None).
    """
    h, S, d_k = q.shape
    d_model = wo_t.shape[-1]

    G = max(1, min(group, h))
    while h % G:
        G -= 1
    n_hg = h // G

    bq = S if (block_q is None or block_q >= S) else block_q
    grid = (pl.cdiv(S, bq), n_hg)

    has_mask = mask_bias is not None
    kernel = _make_attn_kernel(G, has_mask, store_attn)

    in_specs = [
        pl.BlockSpec((G, bq, d_k), lambda qi, hi: (hi, qi, 0)),
        pl.BlockSpec((G, S, d_k), lambda qi, hi: (hi, 0, 0)),
        pl.BlockSpec((G, S, d_k), lambda qi, hi: (hi, 0, 0)),
        pl.BlockSpec((G, bq, S), lambda qi, hi: (hi, qi, 0)),
    ]
    args = [q, k, v, type_scores]
    if has_mask:
        in_specs.append(pl.BlockSpec((bq, S), lambda qi, hi: (qi, 0)))
        args.append(mask_bias)
    in_specs += [
        pl.BlockSpec((h * d_k, d_model), lambda qi, hi: (0, 0)),   # Wo resident
        pl.BlockSpec((1, d_model), lambda qi, hi: (0, 0)),
    ]
    args += [wo_t, bo.reshape(1, d_model)]

    out_spec = pl.BlockSpec((bq, d_model), lambda qi, hi: (qi, 0))  # head-group accumulator
    if store_attn:
        out_shape = (jax.ShapeDtypeStruct((S, d_model), jnp.float32),
                     jax.ShapeDtypeStruct((h, S, S), type_scores.dtype))
        out_specs = (out_spec, pl.BlockSpec((G, bq, S), lambda qi, hi: (hi, qi, 0)))
    else:
        out_shape = jax.ShapeDtypeStruct((S, d_model), jnp.float32)
        out_specs = out_spec

    cp_kwargs = dict(dimension_semantics=("parallel", "arbitrary"))
    if vmem_limit is not None:
        cp_kwargs["vmem_limit_bytes"] = vmem_limit

    outs = pl.pallas_call(
        kernel,
        grid=grid,
        out_shape=out_shape,
        in_specs=in_specs,
        out_specs=out_specs,
        compiler_params=pltpu.CompilerParams(**cp_kwargs),
    )(*args)

    if store_attn:
        return outs
    return outs, None


# ----------------------------------------------------------------------------
# Module wrapper (parameters + light reshapes are plain JAX glue)
# ----------------------------------------------------------------------------
class MultiHeadedAttentionWithTypeScores:
    """JAX/Pallas port of the PyTorch module (inference semantics)."""

    def __init__(self, h, d_model, key, dropout=0.1,
                 compute_dtype=jnp.float32, store_attn=False):
        assert d_model % h == 0
        self.h = h
        self.d_model = d_model
        self.d_k = d_model // h
        self.dropout_p = dropout            # TODO(synk): dropout unused at inference
        self.compute_dtype = compute_dtype
        self.store_attn = store_attn
        self.attn = None

        self._block_q, self._vmem_limit, self._group = _arch_defaults()

        # nn.Linear-style init: U(-1/sqrt(in), 1/sqrt(in)); weights stored
        # pre-transposed as (in, out) so kernels never transpose.
        bound = 1.0 / math.sqrt(d_model)
        keys = jax.random.split(key, 8)

        def u(k, shape):
            return jax.random.uniform(k, shape, jnp.float32, -bound, bound)

        self.wq_t, self.bq = u(keys[0], (d_model, d_model)), u(keys[1], (d_model,))
        self.wk_t, self.bk = u(keys[2], (d_model, d_model)), u(keys[3], (d_model,))
        self.wv_t, self.bv = u(keys[4], (d_model, d_model)), u(keys[5], (d_model,))
        self.wo_t, self.bo = u(keys[6], (d_model, d_model)), u(keys[7], (d_model,))

        # Fold 1/sqrt(d_k) into the f32 Wq/bq masters (kernel path only; the
        # reference keeps the explicit /sqrt(d_k)).
        scale = 1.0 / math.sqrt(self.d_k)
        wq_s = self.wq_t * scale
        bq_s = self.bq * scale

        # Fused QKV weight/bias for the single-matmul projection path.
        self.w_qkv_t = jnp.concatenate([wq_s, self.wk_t, self.wv_t], axis=1)
        self.b_qkv = jnp.concatenate([bq_s, self.bk, self.bv])
        self._bq_scaled = bq_s

        # Pre-cast MXU copies (f32 masters kept for the reference check).
        cd = compute_dtype
        self._w_qkv_c = self.w_qkv_t.astype(cd)
        self._wq_c = wq_s.astype(cd)
        self._wk_c = self.wk_t.astype(cd)
        self._wv_c = self.wv_t.astype(cd)
        self._wo_c = self.wo_t.astype(cd)

    def _split_heads(self, x, S):  # (S, d_model) -> (h, S, d_k)
        return x.reshape(S, self.h, self.d_k).transpose(1, 0, 2)

    def __call__(self, query, key, value, type_scores, mask=None):
        # query/key/value: (S, d_model); type_scores: (1, h, S, S); mask: (1, S, S)
        S = query.shape[0]
        D = self.d_model
        cd = self.compute_dtype

        if query is key and key is value:
            # Self-attention: one fused (S, 3*d_model) projection.
            qkv = pallas_linear(query.astype(cd), self._w_qkv_c, self.b_qkv,
                                out_dtype=cd, vmem_limit=self._vmem_limit)
            q, k, v = qkv[:, :D], qkv[:, D:2 * D], qkv[:, 2 * D:]
        else:
            q = pallas_linear(query.astype(cd), self._wq_c, self._bq_scaled,
                              out_dtype=cd, vmem_limit=self._vmem_limit)
            k = pallas_linear(key.astype(cd), self._wk_c, self.bk,
                              out_dtype=cd, vmem_limit=self._vmem_limit)
            v = pallas_linear(value.astype(cd), self._wv_c, self.bv,
                              out_dtype=cd, vmem_limit=self._vmem_limit)

        qh = self._split_heads(q, S)
        kh = self._split_heads(k, S)
        vh = self._split_heads(v, S)
        ts = type_scores.reshape(self.h, S, S).astype(cd)

        # Additive mask bias (0 where kept, ~-1e9 where masked), streamed as
        # bf16 (half the bytes) and skipped entirely when mask is None.
        if mask is None:
            mask_bias = None
        else:
            mask_bias = jnp.where(mask.reshape(S, S) == 0,
                                  jnp.float32(-1000000000.0),
                                  jnp.float32(0.0)).astype(jnp.bfloat16)

        out, p_attn = pallas_attention_with_type_scores(
            qh, kh, vh, ts, mask_bias, self._wo_c, self.bo,
            block_q=self._block_q, group=self._group,
            store_attn=self.store_attn, vmem_limit=self._vmem_limit)

        self.attn = p_attn.reshape(1, self.h, S, S) if self.store_attn else None
        return out.reshape(1, S, self.d_model)


# ----------------------------------------------------------------------------
# Pure-JAX reference (mirrors the PyTorch forward) for correctness checks
# ----------------------------------------------------------------------------
def reference_forward(mod, query, key, value, type_scores, mask):
    S = query.shape[0]
    hp = lax.Precision.HIGHEST

    def lin(x, wt, b):
        return jnp.dot(x, wt, precision=hp) + b

    def heads(x):
        return x.reshape(S, mod.h, mod.d_k).transpose(1, 0, 2)

    q = heads(lin(query, mod.wq_t, mod.bq))
    k = heads(lin(key, mod.wk_t, mod.bk))
    v = heads(lin(value, mod.wv_t, mod.bv))
    scores = jnp.einsum("hqd,hkd->hqk", q, k, precision=hp) / math.sqrt(mod.d_k)
    if mask is not None:
        scores = jnp.where(mask.reshape(1, S, S) == 0, -1000000000.0, scores)
    p = jax.nn.softmax(scores, axis=-1) * type_scores.reshape(mod.h, S, S)
    ctx = jnp.einsum("hqk,hkd->hqd", p, v, precision=hp)
    x = ctx.transpose(1, 0, 2).reshape(S, mod.h * mod.d_k)
    out = lin(x, mod.wo_t, mod.bo).reshape(1, S, mod.d_model)
    return out, p.reshape(1, mod.h, S, S)


if __name__ == "__main__":
    # Small shapes consistent with the module: seq=8, d_model=32, h=4 (d_k=8)
    S, D, H = 8, 32, 4
    root = jax.random.PRNGKey(0)
    k_mod, k_x, k_q, k_k, k_v, k_ts = jax.random.split(root, 6)

    x = jax.random.normal(k_x, (S, D), jnp.float32)
    type_scores = jax.random.uniform(k_ts, (1, H, S, S), jnp.float32, 0.5, 1.5)
    mask = jnp.tril(jnp.ones((S, S), jnp.int32)).reshape(1, S, S)

    # --- fast path (store_attn=False), self-attention fused QKV, causal mask ---
    mod = MultiHeadedAttentionWithTypeScores(H, D, k_mod)
    out = jax.block_until_ready(mod(x, x, x, type_scores, mask=mask))
    ref, ref_attn = reference_forward(mod, x, x, x, type_scores, mask)
    assert out.shape == (1, S, D)
    assert jnp.allclose(out, ref, atol=2e-3, rtol=2e-3), "fused fast-path mismatch"

    # --- distinct query/key/value (separate-projection path), mask=None ---
    q_in = jax.random.normal(k_q, (S, D), jnp.float32)
    k_in = jax.random.normal(k_k, (S, D), jnp.float32)
    v_in = jax.random.normal(k_v, (S, D), jnp.float32)
    out2 = jax.block_until_ready(mod(q_in, k_in, v_in, type_scores, mask=None))
    ref2, _ = reference_forward(mod, q_in, k_in, v_in, type_scores, None)
    assert jnp.allclose(out2, ref2, atol=2e-3, rtol=2e-3), "cross-attn mismatch"

    # --- store_attn=True path: output + stored attention probabilities ---
    mod_attn = MultiHeadedAttentionWithTypeScores(H, D, k_mod, store_attn=True)
    out3 = jax.block_until_ready(mod_attn(x, x, x, type_scores, mask=mask))
    assert mod_attn.attn.shape == (1, H, S, S)
    assert jnp.allclose(out3, ref, atol=2e-3, rtol=2e-3), "store_attn output mismatch"
    assert jnp.allclose(mod_attn.attn, ref_attn, atol=2e-3, rtol=2e-3), "p_attn mismatch"

    # --- bf16 compute path (recommended MXU operand dtype on v5e/v6e/v7x) ---
    mod_bf16 = MultiHeadedAttentionWithTypeScores(H, D, k_mod,
                                                  compute_dtype=jnp.bfloat16)
    out_bf16 = jax.block_until_ready(mod_bf16(x, x, x, type_scores, mask=mask))
    assert jnp.allclose(out_bf16.astype(jnp.float32), ref, atol=1e-1, rtol=1e-1), \
        "bf16-path mismatch vs reference"

    print("KERNEL_OK")
</pallas_src>

<mosaic_0001>
module attributes {stable_mosaic.version = 11 : i64} {
  func.func @_linear_kernel(%arg0: i32, %arg1: i32, %arg2: memref<8x32xf32, #tpu.memory_space<vmem>>, %arg3: memref<32x96xf32, #tpu.memory_space<vmem>>, %arg4: memref<1x96xf32, #tpu.memory_space<vmem>>, %arg5: memref<8x96xf32, #tpu.memory_space<vmem>>) attributes {dimension_semantics = [#tpu.dimension_semantics<parallel>, #tpu.dimension_semantics<parallel>], iteration_bounds = array<i64: 1, 1>, scalar_prefetch = 0 : i64, scratch_operands = 0 : i64, tpu.core_type = #tpu.core_type<tc>, window_params = [{transform_indices = @transform_0, window_bounds = array<i64: 8, 32>}, {transform_indices = @transform_1, window_bounds = array<i64: 32, 96>}, {transform_indices = @transform_2, window_bounds = array<i64: 1, 96>}, {transform_indices = @transform_3, window_bounds = array<i64: 8, 96>}]} {
    %c0 = arith.constant 0 : index
    %c0_0 = arith.constant 0 : index
    %0 = vector.load %arg2[%c0, %c0_0] : memref<8x32xf32, #tpu.memory_space<vmem>>, vector<8x32xf32>
    %c0_1 = arith.constant 0 : index
    %c0_2 = arith.constant 0 : index
    %1 = vector.load %arg3[%c0_1, %c0_2] : memref<32x96xf32, #tpu.memory_space<vmem>>, vector<32x96xf32>
    %cst = arith.constant dense<0.000000e+00> : vector<8x96xf32>
    %2 = tpu.matmul %0, %1, %cst {dimension_numbers = #tpu.dot_dimension_numbers<[1], [0], [0], [1], [0, 0, 1, 1], [], []>} : vector<8x32xf32>, vector<32x96xf32>, vector<8x96xf32> -> vector<8x96xf32>
    %c0_3 = arith.constant 0 : index
    %c0_4 = arith.constant 0 : index
    %3 = vector.load %arg4[%c0_3, %c0_4] : memref<1x96xf32, #tpu.memory_space<vmem>>, vector<1x96xf32>
    %4 = vector.broadcast %3 : vector<1x96xf32> to vector<8x96xf32>
    %5 = arith.addf %2, %4 : vector<8x96xf32>
    %c0_5 = arith.constant 0 : index
    %c0_6 = arith.constant 0 : index
    %6 = vector.load %arg5[%c0_5, %c0_6] : memref<8x96xf32, #tpu.memory_space<vmem>>, vector<8x96xf32>
    tpu.vector_store %arg5[%c0_5, %c0_6], %5 {strides = array<i32>} : memref<8x96xf32, #tpu.memory_space<vmem>>, vector<8x96xf32>,
    return
  }
  func.func @transform_0(%arg0: i32, %arg1: i32) -> (i32, i32) {
    %c0_i32 = arith.constant 0 : i32
    %c0_i32_0 = arith.constant 0 : i32
    return %arg0, %c0_i32 : i32, i32
  }
  func.func @transform_1(%arg0: i32, %arg1: i32) -> (i32, i32) {
    %c0_i32 = arith.constant 0 : i32
    %c0_i32_0 = arith.constant 0 : i32
    return %c0_i32, %arg1 : i32, i32
  }
  func.func @transform_2(%arg0: i32, %arg1: i32) -> (i32, i32) {
    %c0_i32 = arith.constant 0 : i32
    %c0_i32_0 = arith.constant 0 : i32
    return %c0_i32, %arg1 : i32, i32
  }
  func.func @transform_3(%arg0: i32, %arg1: i32) -> (i32, i32) {
    %c0_i32 = arith.constant 0 : i32
    return %arg0, %arg1 : i32, i32
  }
}

</mosaic_0001>

<llo_original>
// kernel: tpu_custom_call.1
$region0: #{tpu_custom_call.1}
  #allocation0 [shape = 'u32[]', space=smem, size = 0x4, offset = 0x4, fixed_abs, tag = 'smem constant byte address 0x4 - core index']
  #allocation1 [shape = 'u32[144,128]{1,0:T(1,128)}', space=vmem, size = 0x12000, scoped, tag = 'internal scratch']
  %s0 = inlined_call_operand.hbm [shape: f32[8,32], index: 0, kind: input, shape index: {}]
  %s1 = inlined_call_operand.hbm [shape: f32[32,96], index: 1, kind: input, shape index: {}]
  %s2 = inlined_call_operand.vmem [shape: f32[1,96], index: 2, kind: input, shape index: {}]
  %s3 = inlined_call_operand.hbm [shape: f32[8,96], index: 3, kind: output, shape index: {}]
  %s4 = sld [smem:[#allocation0]]
  $region30: #{tpu_custom_call.1} parent=0
    _
  %s6 = ssub.s32 1, %s4
  %s7 = scalar_select 0, %s6, %s4
  $region1: #{tpu_custom_call.1} parent=0
    #allocation2 [shape = 'u8[4096]{0}', space=vmem, size = 0x1000, scoped, tag = 'input window, operand 0, single buffered']
    #allocation3 [shape = 's32[1]{0}', space=sflag, size = 0x4, scoped, tag = 'scoped memory for tpu_custom_call.1']
    #allocation4 [shape = 's32[1]{0}', space=sflag, size = 0x4, scoped, tag = 'scoped memory for tpu_custom_call.1']
    #allocation5 [shape = 'u8[16384]{0}', space=vmem, size = 0x4000, scoped, tag = 'input window, operand 1, single buffered']
    #allocation6 [shape = 's32[1]{0}', space=sflag, size = 0x4, scoped, tag = 'scoped memory for tpu_custom_call.1']
    #allocation7 [shape = 'u8[4096]{0}', space=vmem, size = 0x1000, scoped, tag = 'output window, operand 0, single buffered']
    %8 = vsyncpa [#allocation3], 0
    %9 = vsyncpa [#allocation6], 0
    %10 = vsyncpa [#allocation4], 0
    // Predicated region
    $region2: #{tpu_custom_call.1} parent=1 // pred_check
      _
    $region3: #{tpu_custom_call.1} parent=1 // pred_check_branch
      %12 = sbr.rel (0) target = $region5
    $region4: #{tpu_custom_call.1} parent=1 // pred_region
      %s14 = ssub.s32 128, 128
      %15 = vsyncadd [#allocation3], %s14
      %s17 = sshll.u32 [#allocation2], 4
      %s18 = int_to_ptr.vmem [resolvable:$true] %s17
      %20 = dma.hbm_to_vmem [thread:$0]  %s0, 128, %s18, [#allocation3]
    $region5: #{tpu_custom_call.1} parent=1 // pred_fallthru
      _
    // Predicated region
    $region6: #{tpu_custom_call.1} parent=1 // pred_check
      _
    $region7: #{tpu_custom_call.1} parent=1 // pred_check_branch
      %22 = sbr.rel (0) target = $region9
    $region8: #{tpu_custom_call.1} parent=1 // pred_region
      %s24 = ssub.s32 512, 512
      %25 = vsyncadd [#allocation6], %s24
      %s26 = sshll.u32 [#allocation5], 4
      %s27 = int_to_ptr.vmem [resolvable:$true] %s26
      %32 = dma.hbm_to_vmem [thread:$0]  %s1, 512, %s27, [#allocation6], 128, 128, 8
    $region9: #{tpu_custom_call.1} parent=1 // pred_fallthru
      _
    // Predicated region
    $region10: #{tpu_custom_call.1} parent=1 // pred_check
      _
    $region11: #{tpu_custom_call.1} parent=1 // pred_check_branch
      %34 = sbr.rel (0) target = $region13
    $region12: #{tpu_custom_call.1} parent=1 // pred_region
      _
    $region13: #{tpu_custom_call.1} parent=1 // pred_fallthru
      _
    // Predicated region
    $region14: #{tpu_custom_call.1} parent=1 // pred_check
      _
    $region15: #{tpu_custom_call.1} parent=1 // pred_check_branch
      %36 = sbr.rel (0) target = $region17
    $region16: #{tpu_custom_call.1} parent=1 // pred_region
      %37 = dma.done [#allocation3], 128
    $region17: #{tpu_custom_call.1} parent=1 // pred_fallthru
      _
    // Predicated region
    $region18: #{tpu_custom_call.1} parent=1 // pred_check
      _
    $region19: #{tpu_custom_call.1} parent=1 // pred_check_branch
      %39 = sbr.rel (0) target = $region21
    $region20: #{tpu_custom_call.1} parent=1 // pred_region
      %40 = dma.done [#allocation6], 512
    $region21: #{tpu_custom_call.1} parent=1 // pred_fallthru
      _
    %v41 = vld [vmem:[#allocation2] sm:$0xff]
    %v42 = vld [vmem:[#allocation5] sm:$0xff]
    %v43 = vld [vmem:[#allocation5 + $0x8] sm:$0xff]
    %v44 = vld [vmem:[#allocation5 + $0x10] sm:$0xff]
    %v45 = vld [vmem:[#allocation5 + $0x18] sm:$0xff]
    %v46 = vld [vmem:[%s2] sm:$0x1]
    %v48 = vlaneseq
    %v49 = vshrl.u32 %v48, 7
    %v50 = vsub.s32 0, %v49
    %v51 = vrot.slane %v46, %v50
    %vm53 = vcmask 261120
    %v55 = vsel %vm53, %v41, 0
    %57 = vmatprep.subr.mxu0 0.0
    %58 = vmatpush1.msra.mxu0 %v42
    %59 = vmatprep.subr.mxu0 0.0
    %60 = vmatpush1.msra.mxu0 %v43
    %61 = vmatprep.subr.mxu0 0.0
    %62 = vmatpush1.msra.mxu0 %v44
    %63 = vmatprep.subr.mxu0 0.0
    %64 = vmatpush1.msra.mxu0 %v45
    %65 = vmatprep.subr.mxu0 0.0
    %66 = vmatpush1.msra.mxu0 0.0
    %67 = vmatprep.subr.mxu0 0.0
    %68 = vmatpush1.msra.mxu0 0.0
    %69 = vmatprep.subr.mxu0 0.0
    %70 = vmatpush1.msra.mxu0 0.0
    %71 = vmatprep.subr.mxu0 0.0
    %72 = vmatpush1.msra.mxu0 0.0
    %73 = vmatprep.subr.mxu0 0.0
    %74 = vmatpush1.msra.mxu0 0.0
    %75 = vmatprep.subr.mxu0 0.0
    %76 = vmatpush1.msra.mxu0 0.0
    %77 = vmatprep.subr.mxu0 0.0
    %78 = vmatpush1.msra.mxu0 0.0
    %79 = vmatprep.subr.mxu0 0.0
    %80 = vmatpush1.msra.mxu0 0.0
    %81 = vmatprep.subr.mxu0 0.0
    %82 = vmatpush1.msra.mxu0 0.0
    %83 = vmatprep.subr.mxu0 0.0
    %84 = vmatpush1.msra.mxu0 0.0
    %85 = vmatprep.subr.mxu0 0.0
    %86 = vmatpush1.msra.mxu0 0.0
    %87 = vmatprep.subr.mxu0 0.0
    %88 = vmatpush1.msra.mxu0 0.0
    %89 = vmatprep.subr.mxu0 0.0
    %90 = vmatpush1.msra.mxu0 0.0
    %91 = vmatprep.subr.mxu0 0.0
    %92 = vmatpush1.msra.mxu0 0.0
    %93 = vmatprep.subr.mxu0 0.0
    %94 = vmatpush1.msra.mxu0 0.0
    %95 = vmatprep.subr.mxu0 0.0
    %96 = vmatpush1.msra.mxu0 0.0
    %97 = vmatprep.subr.mxu0 0.0
    %98 = vmatpush1.msra.mxu0 0.0
    %99 = vmatprep.subr.mxu0 0.0
    %100 = vmatpush1.msra.mxu0 0.0
    %101 = vmatprep.subr.mxu0 0.0
    %102 = vmatpush1.msra.mxu0 0.0
    %103 = vmatprep.subr.mxu0 0.0
    %104 = vmatpush1.msra.mxu0 0.0
    %105 = vmatprep.subr.mxu0 0.0
    %106 = vmatpush1.msra.mxu0 0.0
    %107 = vmatprep.subr.mxu0 0.0
    %108 = vmatpush1.msra.mxu0 0.0
    %109 = vmatprep.subr.mxu0 0.0
    %110 = vmatpush1.msra.mxu0 0.0
    %111 = vmatprep.subr.mxu0 0.0
    %112 = vmatpush1.msra.mxu0 0.0
    %113 = vmatprep.subr.mxu0 0.0
    %114 = vmatpush1.msra.mxu0 0.0
    %115 = vmatprep.subr.mxu0 0.0
    %116 = vmatpush1.msra.mxu0 0.0
    %117 = vmatprep.subr.mxu0 0.0
    %118 = vmatpush1.msra.mxu0 0.0
    %119 = vmatprep.subr.mxu0 0.0
    %120 = vmatpush1.msra.mxu0 0.0
    %121 = vmatprep.mubr.f32.mxu0 0.0
    %122 = vmatmul.mubr.f32.gmra.mrb[0].mxu0 %v55
    %v123 = vpop.f32.mrb[0].mxu0
    %v124 = vadd.f32 %v51, %v123
    %v125 = vpop.f32.mrb[0].mxu0
    %126 = vdwg.mxu0
    %vm127 = vcmask 785408
    %128 = vst.msk [vmem:[#allocation7] sm:$0xff] %vm127, %v124
    // Predicated region
    $region22: #{tpu_custom_call.1} parent=1 // pred_check
      _
    $region23: #{tpu_custom_call.1} parent=1 // pred_check_branch
      %130 = sbr.rel (0) target = $region25
    $region24: #{tpu_custom_call.1} parent=1 // pred_region
      %s132 = ssub.s32 128, 128
      %133 = vsyncadd [#allocation4], %s132
      %s135 = sshll.u32 [#allocation7], 4
      %s136 = int_to_ptr.vmem [resolvable:$true] %s135
      %138 = dma.vmem_to_hbm [thread:$0]  %s136, 128, %s3, [#allocation4]
    $region25: #{tpu_custom_call.1} parent=1 // pred_fallthru
      _
    // Predicated region
    $region26: #{tpu_custom_call.1} parent=1 // pred_check
      _
    $region27: #{tpu_custom_call.1} parent=1 // pred_check_branch
      %140 = sbr.rel (0) target = $region29
    $region28: #{tpu_custom_call.1} parent=1 // pred_region
      %141 = dma.done [#allocation4], 128
    $region29: #{tpu_custom_call.1} parent=1 // pred_fallthru
      _
    %142 = vsyncpa [#allocation3], 1
    %143 = vsyncpa [#allocation6], 1
    %144 = vsyncpa [#allocation4], 1

</llo_original>
